<compile_context>
chip_gen: v7x
topology: tpu7x:2x2x1
jax: 0.10.0
libtpu: 0.0.40
codegen_flags: <defaults>
</compile_context>

<pallas_src>
import jax
import jax.numpy as jnp
from jax import lax
from jax.experimental import pallas as pl
from jax.experimental.pallas import tpu as pltpu


C_IN = 128  # fixed by the module definition (nn.Conv2d(128, ...))


def _yolo_head_kernel(x_ref, w_ref, b_ref, o_ref):
    # x_ref: (1, C_in, T)  NCHW-ordered block
    # w_ref: (C_in, C_out) resident across the grid
    # b_ref: (1, C_out)
    # o_ref: (1, T, C_out) -> already NHWC order
    x_blk = x_ref[0]  # (C_in, T)
    acc = lax.dot_general(
        x_blk, w_ref[...],
        dimension_numbers=(((0,), (0,)), ((), ())),   # contract over C_in
        preferred_element_type=jnp.float32)           # (T, C_out)
    o_ref[0] = (acc + b_ref[...]).astype(o_ref.dtype)


def _pick_tile_hw(hw: int) -> int:
    """Spatial tile: lane-dense multiple of 128 when tiling, full extent when small.

    2048 rows x 128 ch x 4B = 1 MiB per x buffer (x2 double-buffered) -- fits the
    scoped-VMEM default on v5e (16 MiB), v6e (32 MiB) and v7x (32 MiB / 64 MiB phys).
    """
    if hw <= 2048:
        return hw                      # full extent: always a legal block shape
    for t in (2048, 1024, 512, 256, 128):
        if hw % t == 0:
            return t
    return 2048                        # non-divisible grid; Pallas masks the ragged edge


def yolo_head_forward(x_nchw, weight, bias):
    """x_nchw: (N, 128, H, W); weight: (C_out, 128) [1x1 conv kernel squeezed];
    bias: (C_out,).  Returns (N, H, W, C_out) = conv(x).permute(0, 2, 3, 1)."""
    n, c_in, h, w = x_nchw.shape
    assert c_in == C_IN
    c_out = weight.shape[0]
    hw = h * w

    # Free, contiguous views only (no HBM transpose of the activations).
    x3d = x_nchw.reshape(n, c_in, hw)        # (N, C_in, H*W), still NCHW order
    wt = jnp.transpose(weight, (1, 0))       # (C_in, C_out) -- tiny
    b2d = bias.reshape(1, c_out)

    tile_hw = _pick_tile_hw(hw)
    grid = (n, pl.cdiv(hw, tile_hw))

    itemsize = jnp.dtype(x_nchw.dtype).itemsize
    cost = pl.CostEstimate(
        flops=2 * n * hw * c_in * c_out,
        transcendentals=0,
        bytes_accessed=(n * hw * c_in * itemsize        # activations (read once)
                        + c_in * c_out * 4 + c_out * 4  # weight + bias
                        + n * hw * c_out * itemsize),   # output
    )

    out3d = pl.pallas_call(
        _yolo_head_kernel,
        out_shape=jax.ShapeDtypeStruct((n, hw, c_out), x_nchw.dtype),
        grid=grid,
        in_specs=[
            pl.BlockSpec((1, c_in, tile_hw), lambda b, t: (b, 0, t)),
            pl.BlockSpec((c_in, c_out), lambda b, t: (0, 0)),   # VMEM-resident
            pl.BlockSpec((1, c_out), lambda b, t: (0, 0)),      # VMEM-resident
        ],
        out_specs=pl.BlockSpec((1, tile_hw, c_out), lambda b, t: (b, t, 0)),
        compiler_params=pltpu.CompilerParams(
            dimension_semantics=("parallel", "parallel")),
        cost_estimate=cost,
    )(x3d, wt, b2d)

    return out3d.reshape(n, h, w, c_out)


class YOLOHeadPallas:
    def __init__(self, grid_size, num_classes, num_anchors, key):
        self.grid_size = grid_size
        self.num_classes = num_classes
        self.num_anchors = num_anchors
        c_out = num_anchors * (5 + num_classes)
        kw, kb = jax.random.split(key)
        # Deterministic init mimicking PyTorch Conv2d default (uniform in +-1/sqrt(fan_in)).
        bound = 1.0 / (C_IN ** 0.5)
        self.weight = jax.random.uniform(
            kw, (c_out, C_IN), jnp.float32, minval=-bound, maxval=bound)
        self.bias = jax.random.uniform(
            kb, (c_out,), jnp.float32, minval=-bound, maxval=bound)

    def __call__(self, x_nchw):
        return yolo_head_forward(x_nchw, self.weight, self.bias)


if __name__ == "__main__":
    key = jax.random.PRNGKey(0)
    k_param, k_x = jax.random.split(key)

    # Small, module-consistent shapes: batch=2, in-channels fixed at 128,
    # grid (spatial) = 8x8, num_classes=3, num_anchors=3 -> C_out = 24.
    batch, grid_size, num_classes, num_anchors = 2, 8, 3, 3
    head = YOLOHeadPallas(grid_size, num_classes, num_anchors, k_param)

    x = jax.random.normal(k_x, (batch, C_IN, grid_size, grid_size), jnp.float32)

    out = head(x)
    out = jax.block_until_ready(out)

    # Sanity check against a pure-JAX reference of the same math
    # (conv1x1 + permute(0,2,3,1)).
    ref = jnp.einsum("nchw,oc->nhwo", x, head.weight) + head.bias
    assert out.shape == (batch, grid_size, grid_size,
                         num_anchors * (5 + num_classes))
    assert jnp.allclose(out, ref, atol=1e-4, rtol=1e-4)

    print("KERNEL_OK")
</pallas_src>

<mosaic_0001>
module attributes {stable_mosaic.version = 11 : i64} {
  func.func @_yolo_head_kernel(%arg0: i32, %arg1: i32, %arg2: memref<1x128x64xf32, #tpu.memory_space<vmem>>, %arg3: memref<128x24xf32, #tpu.memory_space<vmem>>, %arg4: memref<1x24xf32, #tpu.memory_space<vmem>>, %arg5: memref<1x64x24xf32, #tpu.memory_space<vmem>>) attributes {dimension_semantics = [#tpu.dimension_semantics<parallel>, #tpu.dimension_semantics<parallel>], iteration_bounds = array<i64: 2, 1>, scalar_prefetch = 0 : i64, scratch_operands = 0 : i64, tpu.core_type = #tpu.core_type<tc>, window_params = [{transform_indices = @transform_0, window_bounds = array<i64: 1, 128, 64>}, {pipeline_mode = #tpu.pipeline_mode<synchronous>, transform_indices = @transform_1, window_bounds = array<i64: 128, 24>}, {pipeline_mode = #tpu.pipeline_mode<synchronous>, transform_indices = @transform_2, window_bounds = array<i64: 1, 24>}, {transform_indices = @transform_3, window_bounds = array<i64: 1, 64, 24>}]} {
    %c0 = arith.constant 0 : index
    %c0_0 = arith.constant 0 : index
    %c0_1 = arith.constant 0 : index
    %0 = vector.load %arg2[%c0, %c0_0, %c0_1] : memref<1x128x64xf32, #tpu.memory_space<vmem>>, vector<1x128x64xf32>
    %1 = vector.shape_cast %0 : vector<1x128x64xf32> to vector<128x64xf32>
    %c0_2 = arith.constant 0 : index
    %c0_3 = arith.constant 0 : index
    %2 = vector.load %arg3[%c0_2, %c0_3] : memref<128x24xf32, #tpu.memory_space<vmem>>, vector<128x24xf32>
    %cst = arith.constant dense<0.000000e+00> : vector<64x24xf32>
    %3 = tpu.matmul %1, %2, %cst {dimension_numbers = #tpu.dot_dimension_numbers<[0], [0], [1], [1], [0, 1, 1, 1], [], []>} : vector<128x64xf32>, vector<128x24xf32>, vector<64x24xf32> -> vector<64x24xf32>
    %c0_4 = arith.constant 0 : index
    %c0_5 = arith.constant 0 : index
    %4 = vector.load %arg4[%c0_4, %c0_5] : memref<1x24xf32, #tpu.memory_space<vmem>>, vector<1x24xf32>
    %5 = vector.broadcast %4 : vector<1x24xf32> to vector<64x24xf32>
    %6 = arith.addf %3, %5 : vector<64x24xf32>
    %c0_6 = arith.constant 0 : index
    %c0_7 = arith.constant 0 : index
    %c0_8 = arith.constant 0 : index
    %7 = vector.load %arg5[%c0_6, %c0_7, %c0_8] : memref<1x64x24xf32, #tpu.memory_space<vmem>>, vector<1x64x24xf32>
    %8 = vector.shape_cast %7 : vector<1x64x24xf32> to vector<64x24xf32>
    %9 = vector.shape_cast %6 : vector<64x24xf32> to vector<1x64x24xf32>
    tpu.vector_store %arg5[%c0_6, %c0_7, %c0_8], %9 {strides = array<i32>} : memref<1x64x24xf32, #tpu.memory_space<vmem>>, vector<1x64x24xf32>,
    return
  }
  func.func @transform_0(%arg0: i32, %arg1: i32) -> (i32, i32, i32) {
    %c0_i32 = arith.constant 0 : i32
    %c0_i32_0 = arith.constant 0 : i32
    return %arg0, %c0_i32, %arg1 : i32, i32, i32
  }
  func.func @transform_1(%arg0: i32, %arg1: i32) -> (i32, i32) {
    %c0_i32 = arith.constant 0 : i32
    %c0_i32_0 = arith.constant 0 : i32
    %c0_i32_1 = arith.constant 0 : i32
    return %c0_i32, %c0_i32_0 : i32, i32
  }
  func.func @transform_2(%arg0: i32, %arg1: i32) -> (i32, i32) {
    %c0_i32 = arith.constant 0 : i32
    %c0_i32_0 = arith.constant 0 : i32
    %c0_i32_1 = arith.constant 0 : i32
    return %c0_i32, %c0_i32_0 : i32, i32
  }
  func.func @transform_3(%arg0: i32, %arg1: i32) -> (i32, i32, i32) {
    %c0_i32 = arith.constant 0 : i32
    %c0_i32_0 = arith.constant 0 : i32
    return %arg0, %arg1, %c0_i32 : i32, i32, i32
  }
}

</mosaic_0001>

<llo_original>
// kernel: tpu_custom_call.1
$region0: #{tpu_custom_call.1}
  #allocation0 [shape = 'u32[]', space=smem, size = 0x4, offset = 0x4, fixed_abs, tag = 'smem constant byte address 0x4 - core index']
  #allocation1 [shape = 'u32[144,128]{1,0:T(1,128)}', space=vmem, size = 0x12000, scoped, tag = 'internal scratch']
  %s0 = inlined_call_operand.vmem [shape: f32[2,128,64], index: 0, kind: input, shape index: {}]
  %s1 = inlined_call_operand.vmem [shape: f32[128,24], index: 1, kind: input, shape index: {}]
  %s2 = inlined_call_operand.vmem [shape: f32[1,24], index: 2, kind: input, shape index: {}]
  %s3 = inlined_call_operand.vmem [shape: f32[2,64,24], index: 3, kind: output, shape index: {}]
  %s4 = sld [smem:[#allocation0]]
  $region45: #{tpu_custom_call.1} parent=0
    _
  %s6 = ssub.s32 1, %s4
  %s7 = scalar_select 0, %s6, %s4
  loop: start=0, step=1, limit=4
  $region2: #{tpu_custom_call.1} parent=0 // loop_pre_header
    _
  $region3: #{tpu_custom_call.1} parent=0 // loop_header
    %s9 = sphi 0, %s13
    %p10 = scmp.ge.s32.totalorder %s9, 4
    %s16 = sphi 0, %s28
    %s17 = sphi 0, %s24
    %s18 = sphi 0, %s16
    %s19 = sphi 0, %s17
    %s20 = sphi 0, %s18
    %s21 = sphi 0, %s19
    %s33 = sphi 0, %s35
    %s36 = sphi 0, %s33
    %s37 = sphi 0, %s36
    %s53 = sphi 0, %s37
    %s57 = sphi 0, %s57
    %s59 = sphi 0, %s57
    %s60 = sphi 0, %s59
    %s74 = sphi 0, %s60
    %s78 = sphi 0, %s78
    %s80 = sphi 0, %s78
    %s81 = sphi 0, %s80
    %s95 = sphi 0, %s81
    %s103 = sphi 0, %s105
    %s106 = sphi 0, %s103
    %s107 = sphi 0, %s106
    %s123 = sphi 0, %s107
  $region4: #{tpu_custom_call.1} parent=0 // loop_header_branch
    %12 = sbr.rel (%p10) target = $region8
  $region5: #{tpu_custom_call.1} parent=0 // loop_body
    %s14 = ssub.s32 %s9, 1
    %s15 = ssub.s32 %s9, 2
    %s22 = sadd.s32 1, %s17
    %p23 = scmp.ge.s32.totalorder %s22, 1
    %s24 = scalar_select %p23, 0, %s22
    %s25 = sadd.s32 1, %s16
    %s26 = scalar_select %p23, %s25, %s16
    %p27 = scmp.ge.s32.totalorder %s26, 2
    %s28 = scalar_select %p27, 0, %s26
    %s29 = ssub.s32 %s16, %s28
    %s30 = ssub.s32 %s17, %s24
    %s31 = sor.u32 %s29, %s30
    %p32 = scmp.eq.s32.totalorder %s31, 0
    %s34 = sadd.s32 %s33, 1
    %s35 = scalar_select %p32, %s33, %s34
    %p38 = pneg %p32
    %p39 = scmp.eq.s32.totalorder %s9, 1
    %p40 = por %p38, %p39
    %p41 = scmp.ne.s32.totalorder %s33, %s36
    %p42 = scmp.eq.s32.totalorder %s9, 0
    %p43 = por %p41, %p42
    %p44 = scmp.ne.s32.totalorder %s33, %s36
    %p45 = scmp.eq.s32.totalorder %s14, 1
    %p46 = por %p44, %p45
    %p47 = scmp.ne.s32.totalorder %s36, %s37
    %p48 = scmp.eq.s32.totalorder %s14, 0
    %p49 = por %p47, %p48
    %p50 = scmp.ne.s32.totalorder %s36, %s37
    %p51 = scmp.eq.s32.totalorder %s15, 1
    %p52 = por %p50, %p51
    %p54 = scmp.ne.s32.totalorder %s37, %s53
    %p55 = scmp.eq.s32.totalorder %s15, 0
    %p56 = por %p54, %p55
    %s58 = sadd.s32 %s57, 1
    %p61 = scmp.eq.s32.totalorder %s9, 1
    %p62 = scmp.ne.s32.totalorder %s57, %s59
    %p63 = scmp.eq.s32.totalorder %s9, 0
    %p64 = por %p62, %p63
    %p65 = scmp.ne.s32.totalorder %s57, %s59
    %p66 = scmp.eq.s32.totalorder %s14, 1
    %p67 = por %p65, %p66
    %p68 = scmp.ne.s32.totalorder %s59, %s60
    %p69 = scmp.eq.s32.totalorder %s14, 0
    %p70 = por %p68, %p69
    %p71 = scmp.ne.s32.totalorder %s59, %s60
    %p72 = scmp.eq.s32.totalorder %s15, 1
    %p73 = por %p71, %p72
    %p75 = scmp.ne.s32.totalorder %s60, %s74
    %p76 = scmp.eq.s32.totalorder %s15, 0
    %p77 = por %p75, %p76
    %s79 = sadd.s32 %s78, 1
    %p82 = scmp.eq.s32.totalorder %s9, 1
    %p83 = scmp.ne.s32.totalorder %s78, %s80
    %p84 = scmp.eq.s32.totalorder %s9, 0
    %p85 = por %p83, %p84
    %p86 = scmp.ne.s32.totalorder %s78, %s80
    %p87 = scmp.eq.s32.totalorder %s14, 1
    %p88 = por %p86, %p87
    %p89 = scmp.ne.s32.totalorder %s80, %s81
    %p90 = scmp.eq.s32.totalorder %s14, 0
    %p91 = por %p89, %p90
    %p92 = scmp.ne.s32.totalorder %s80, %s81
    %p93 = scmp.eq.s32.totalorder %s15, 1
    %p94 = por %p92, %p93
    %p96 = scmp.ne.s32.totalorder %s81, %s95
    %p97 = scmp.eq.s32.totalorder %s15, 0
    %p98 = por %p96, %p97
    %s99 = ssub.s32 %s16, %s28
    %s100 = ssub.s32 %s17, %s24
    %s101 = sor.u32 %s99, %s100
    %p102 = scmp.eq.s32.totalorder %s101, 0
    %s104 = sadd.s32 %s103, 1
    %s105 = scalar_select %p102, %s103, %s104
    %p108 = pneg %p102
    %p109 = scmp.eq.s32.totalorder %s9, 1
    %p110 = por %p108, %p109
    %p111 = scmp.ne.s32.totalorder %s103, %s106
    %p112 = scmp.eq.s32.totalorder %s9, 0
    %p113 = por %p111, %p112
    %p114 = scmp.ne.s32.totalorder %s103, %s106
    %p115 = scmp.eq.s32.totalorder %s14, 1
    %p116 = por %p114, %p115
    %p117 = scmp.ne.s32.totalorder %s106, %s107
    %p118 = scmp.eq.s32.totalorder %s14, 0
    %p119 = por %p117, %p118
    %p120 = scmp.ne.s32.totalorder %s106, %s107
    %p121 = scmp.eq.s32.totalorder %s15, 1
    %p122 = por %p120, %p121
    %p124 = scmp.ne.s32.totalorder %s107, %s123
    %p125 = scmp.eq.s32.totalorder %s15, 0
    %p126 = por %p124, %p125
    %p127 = scmp.le.s32.totalorder 1, %s9
    %p128 = scmp.lt.s32.totalorder %s9, 3
    %p129 = pnand %p127, %p128
    %p130 = pneg %p129
    // Predicated region
    $region9: #{tpu_custom_call.1} parent=5 // pred_check
      _
    $region10: #{tpu_custom_call.1} parent=5 // pred_check_branch
      %132 = sbr.rel (%p129) target = $region12
    $region11: #{tpu_custom_call.1} parent=5 // pred_region
      %s133 = ssub.s32 %s9, 1
      // Predicated region
      $region13: #{tpu_custom_call.1} parent=11 // pred_check
        %p134 = pneg %p70
      $region14: #{tpu_custom_call.1} parent=11 // pred_check_branch
        %136 = sbr.rel (%p134) target = $region16
      $region15: #{tpu_custom_call.1} parent=11 // pred_region
        _
      $region16: #{tpu_custom_call.1} parent=11 // pred_fallthru
        _
      // Predicated region
      $region17: #{tpu_custom_call.1} parent=11 // pred_check
        %p137 = pneg %p91
      $region18: #{tpu_custom_call.1} parent=11 // pred_check_branch
        %139 = sbr.rel (%p137) target = $region20
      $region19: #{tpu_custom_call.1} parent=11 // pred_region
        _
      $region20: #{tpu_custom_call.1} parent=11 // pred_fallthru
        _
    $region12: #{tpu_custom_call.1} parent=5 // pred_fallthru
      _
    %p140 = scmp.lt.s32.totalorder %s9, 2
    // Predicated region
    $region21: #{tpu_custom_call.1} parent=5 // pred_check
      %p141 = pneg %p140
    $region22: #{tpu_custom_call.1} parent=5 // pred_check_branch
      %143 = sbr.rel (%p141) target = $region24
    $region23: #{tpu_custom_call.1} parent=5 // pred_region
      // Predicated region
      $region25: #{tpu_custom_call.1} parent=23 // pred_check
        %p144 = pneg %p43
      $region26: #{tpu_custom_call.1} parent=23 // pred_check_branch
        %146 = sbr.rel (%p144) target = $region28
      $region27: #{tpu_custom_call.1} parent=23 // pred_region
        %p147 = scmp.lt.s32.totalorder %s16, 1
        %s148 = scalar_select %p147, %s16, 1
        %p149 = scmp.lt.s32.totalorder %s17, 0
        %s150 = scalar_select %p149, %s17, 0
        %s151 = smul.addr %s148, 16
        %s152 = sadd.s32 %s150, %s151
        %s153 = smul.addr %s152, 8
        %s154 = scalar_lea.vmem %s0, %s153
      $region28: #{tpu_custom_call.1} parent=23 // pred_fallthru
        _
    $region24: #{tpu_custom_call.1} parent=5 // pred_fallthru
      _
    %p155 = scmp.le.s32.totalorder 1, %s9
    %p156 = scmp.lt.s32.totalorder %s9, 3
    %p157 = pnand %p155, %p156
    %p158 = pneg %p157
    // Predicated region
    $region29: #{tpu_custom_call.1} parent=5 // pred_check
      _
    $region30: #{tpu_custom_call.1} parent=5 // pred_check_branch
      %160 = sbr.rel (%p157) target = $region32
    $region31: #{tpu_custom_call.1} parent=5 // pred_region
      %s161 = ssub.s32 %s9, 1
      %p162 = scmp.lt.s32.totalorder %s18, 1
      %s163 = scalar_select %p162, %s18, 1
      %p164 = scmp.lt.s32.totalorder %s19, 0
      %s165 = scalar_select %p164, %s19, 0
      %s166 = smul.addr %s163, 16
      %s167 = sadd.s32 %s165, %s166
      %s168 = smul.addr %s167, 8
      %s169 = scalar_lea.vmem %s0, %s168
      %p170 = pneg %p49
      %p171 = pneg %p46
      %p172 = pneg %p70
      %p173 = pneg %p67
      %p174 = pneg %p91
      %p175 = pneg %p88
      %p176 = pneg %p119
      %p177 = pneg %p116
      %s178 = smul.u32 8, %s19
      %p179 = scmp.lt.s32.totalorder %s18, 1
      %s180 = scalar_select %p179, %s18, 1
      %p181 = scmp.lt.s32.totalorder %s178, 7
      %s182 = scalar_select %p181, %s178, 7
      %s183 = smul.addr %s180, 8
      %s184 = sadd.s32 %s182, %s183
      %s185 = smul.addr %s184, 8
      %s186 = scalar_lea.vmem %s3, %s185
      %p187 = scmp.lt.s32.totalorder %s18, 1
      %s188 = scalar_select %p187, %s18, 1
      %p189 = scmp.lt.s32.totalorder %s19, 0
      %s190 = scalar_select %p189, %s19, 0
      %s191 = smul.addr %s188, 16
      %s192 = sadd.s32 %s190, %s191
      %s193 = smul.addr %s192, 8
      %s194 = scalar_lea.vmem %s0, %s193
      %s195 = smul.u32 8, %s19
      %p196 = scmp.lt.s32.totalorder %s18, 1
      %s197 = scalar_select %p196, %s18, 1
      %p198 = scmp.lt.s32.totalorder %s195, 7
      %s199 = scalar_select %p198, %s195, 7
      %s200 = smul.addr %s197, 8
      %s201 = sadd.s32 %s199, %s200
      %s202 = smul.addr %s201, 8
      %s203 = scalar_lea.vmem %s3, %s202
      %s204 = smul.u32 8, %s19
      %v205 = vld [vmem:[%s194] sm:$0xff]
      %v206 = vld [vmem:[%s194 + $0x8] sm:$0xff]
      %v207 = vld [vmem:[%s194 + $0x10] sm:$0xff]
      %v208 = vld [vmem:[%s194 + $0x18] sm:$0xff]
      %v209 = vld [vmem:[%s194 + $0x20] sm:$0xff]
      %v210 = vld [vmem:[%s194 + $0x28] sm:$0xff]
      %v211 = vld [vmem:[%s194 + $0x30] sm:$0xff]
      %v212 = vld [vmem:[%s194 + $0x38] sm:$0xff]
      %v213 = vld [vmem:[%s194 + $0x40] sm:$0xff]
      %v214 = vld [vmem:[%s194 + $0x48] sm:$0xff]
      %v215 = vld [vmem:[%s194 + $0x50] sm:$0xff]
      %v216 = vld [vmem:[%s194 + $0x58] sm:$0xff]
      %v217 = vld [vmem:[%s194 + $0x60] sm:$0xff]
      %v218 = vld [vmem:[%s194 + $0x68] sm:$0xff]
      %v219 = vld [vmem:[%s194 + $0x70] sm:$0xff]
      %v220 = vld [vmem:[%s194 + $0x78] sm:$0xff]
      %v221 = vld [vmem:[%s1] sm:$0xff]
      %v222 = vld [vmem:[%s1 + $0x8] sm:$0xff]
      %v223 = vld [vmem:[%s1 + $0x10] sm:$0xff]
      %v224 = vld [vmem:[%s1 + $0x18] sm:$0xff]
      %v225 = vld [vmem:[%s1 + $0x20] sm:$0xff]
      %v226 = vld [vmem:[%s1 + $0x28] sm:$0xff]
      %v227 = vld [vmem:[%s1 + $0x30] sm:$0xff]
      %v228 = vld [vmem:[%s1 + $0x38] sm:$0xff]
      %v229 = vld [vmem:[%s1 + $0x40] sm:$0xff]
      %v230 = vld [vmem:[%s1 + $0x48] sm:$0xff]
      %v231 = vld [vmem:[%s1 + $0x50] sm:$0xff]
      %v232 = vld [vmem:[%s1 + $0x58] sm:$0xff]
      %v233 = vld [vmem:[%s1 + $0x60] sm:$0xff]
      %v234 = vld [vmem:[%s1 + $0x68] sm:$0xff]
      %v235 = vld [vmem:[%s1 + $0x70] sm:$0xff]
      %v236 = vld [vmem:[%s1 + $0x78] sm:$0xff]
      %v237 = vld [vmem:[%s2] sm:$0x1]
      %v239 = vlaneseq
      %v240 = vshrl.u32 %v239, 7
      %v241 = vsub.s32 0, %v240
      %v242 = vrot.slane %v237, %v241
      %244 = vxpose.xlu0.b32.start [1/16] %v205, 128
      %245 = vxpose.xlu0.b32.cont [2/16] %v206, 128
      %246 = vxpose.xlu0.b32.cont [3/16] %v207, 128
      %247 = vxpose.xlu0.b32.cont [4/16] %v208, 128
      %248 = vxpose.xlu0.b32.cont [5/16] %v209, 128
      %249 = vxpose.xlu0.b32.cont [6/16] %v210, 128
      %250 = vxpose.xlu0.b32.cont [7/16] %v211, 128
      %251 = vxpose.xlu0.b32.cont [8/16] %v212, 128
      %252 = vxpose.xlu0.b32.cont [9/16] %v213, 128
      %253 = vxpose.xlu0.b32.cont [10/16] %v214, 128
      %254 = vxpose.xlu0.b32.cont [11/16] %v215, 128
      %255 = vxpose.xlu0.b32.cont [12/16] %v216, 128
      %256 = vxpose.xlu0.b32.cont [13/16] %v217, 128
      %257 = vxpose.xlu0.b32.cont [14/16] %v218, 128
      %258 = vxpose.xlu0.b32.cont [15/16] %v219, 128
      %259 = vxpose.xlu0.b32.end [16/16] %v220, 128
      %v260 = vpop.trf.xlu0
      %v261 = vpop.trf.xlu0
      %v262 = vpop.trf.xlu0
      %v263 = vpop.trf.xlu0
      %v264 = vpop.trf.xlu0
      %v265 = vpop.trf.xlu0
      %v266 = vpop.trf.xlu0
      %v267 = vpop.trf.xlu0
      %v268 = vpop.trf.xlu0
      %v269 = vpop.trf.xlu0
      %v270 = vpop.trf.xlu0
      %v271 = vpop.trf.xlu0
      %v272 = vpop.trf.xlu0
      %v273 = vpop.trf.xlu0
      %v274 = vpop.trf.xlu0
      %v275 = vpop.trf.xlu0
      %276 = vmatprep.subr.mxu0 0.0
      %277 = vmatpush1.msra.mxu0 %v221
      %278 = vmatprep.subr.mxu0 0.0
      %279 = vmatpush1.msra.mxu0 %v222
      %280 = vmatprep.subr.mxu0 0.0
      %281 = vmatpush1.msra.mxu0 %v223
      %282 = vmatprep.subr.mxu0 0.0
      %283 = vmatpush1.msra.mxu0 %v224
      %284 = vmatprep.subr.mxu0 0.0
      %285 = vmatpush1.msra.mxu0 %v225
      %286 = vmatprep.subr.mxu0 0.0
      %287 = vmatpush1.msra.mxu0 %v226
      %288 = vmatprep.subr.mxu0 0.0
      %289 = vmatpush1.msra.mxu0 %v227
      %290 = vmatprep.subr.mxu0 0.0
      %291 = vmatpush1.msra.mxu0 %v228
      %292 = vmatprep.subr.mxu0 0.0
      %293 = vmatpush1.msra.mxu0 %v229
      %294 = vmatprep.subr.mxu0 0.0
      %295 = vmatpush1.msra.mxu0 %v230
      %296 = vmatprep.subr.mxu0 0.0
      %297 = vmatpush1.msra.mxu0 %v231
      %298 = vmatprep.subr.mxu0 0.0
      %299 = vmatpush1.msra.mxu0 %v232
      %300 = vmatprep.subr.mxu0 0.0
      %301 = vmatpush1.msra.mxu0 %v233
      %302 = vmatprep.subr.mxu0 0.0
      %303 = vmatpush1.msra.mxu0 %v234
      %304 = vmatprep.subr.mxu0 0.0
      %305 = vmatpush1.msra.mxu0 %v235
      %306 = vmatprep.subr.mxu0 0.0
      %307 = vmatpush1.msra.mxu0 %v236
      %308 = vmatprep.subr.mxu0 0.0
      %309 = vmatpush1.msra.mxu0 0.0
      %310 = vmatprep.subr.mxu0 0.0
      %311 = vmatpush1.msra.mxu0 0.0
      %312 = vmatprep.subr.mxu0 0.0
      %313 = vmatpush1.msra.mxu0 0.0
      %314 = vmatprep.subr.mxu0 0.0
      %315 = vmatpush1.msra.mxu0 0.0
      %316 = vmatprep.subr.mxu0 0.0
      %317 = vmatpush1.msra.mxu0 0.0
      %318 = vmatprep.subr.mxu0 0.0
      %319 = vmatpush1.msra.mxu0 0.0
      %320 = vmatprep.subr.mxu0 0.0
      %321 = vmatpush1.msra.mxu0 0.0
      %322 = vmatprep.subr.mxu0 0.0
      %323 = vmatpush1.msra.mxu0 0.0
      %324 = vmatprep.subr.mxu0 0.0
      %325 = vmatpush1.msra.mxu0 0.0
      %326 = vmatprep.subr.mxu0 0.0
      %327 = vmatpush1.msra.mxu0 0.0
      %328 = vmatprep.subr.mxu0 0.0
      %329 = vmatpush1.msra.mxu0 0.0
      %330 = vmatprep.subr.mxu0 0.0
      %331 = vmatpush1.msra.mxu0 0.0
      %332 = vmatprep.subr.mxu0 0.0
      %333 = vmatpush1.msra.mxu0 0.0
      %334 = vmatprep.subr.mxu0 0.0
      %335 = vmatpush1.msra.mxu0 0.0
      %336 = vmatprep.subr.mxu0 0.0
      %337 = vmatpush1.msra.mxu0 0.0
      %338 = vmatprep.subr.mxu0 0.0
      %339 = vmatpush1.msra.mxu0 0.0
      %340 = vmatprep.mubr.f32.mxu0 0.0
      %341 = vmatmul.mubr.f32.gmra.mrb[0].mxu0 %v260
      %v342 = vpop.f32.mrb[0].mxu0
      %v343 = vadd.f32 %v242, %v342
      %v344 = vpop.f32.mrb[0].mxu0
      %345 = vmatprep.mubr.f32.mxu0 0.0
      %346 = vmatmul.mubr.f32.gmra.mrb[0].mxu0 %v261
      %v347 = vpop.f32.mrb[0].mxu0
      %v348 = vadd.f32 %v242, %v347
      %v349 = vpop.f32.mrb[0].mxu0
      %350 = vmatprep.mubr.f32.mxu0 0.0
      %351 = vmatmul.mubr.f32.gmra.mrb[0].mxu0 %v262
      %v352 = vpop.f32.mrb[0].mxu0
      %v353 = vadd.f32 %v242, %v352
      %v354 = vpop.f32.mrb[0].mxu0
      %355 = vmatprep.mubr.f32.mxu0 0.0
      %356 = vmatmul.mubr.f32.gmra.mrb[0].mxu0 %v263
      %v357 = vpop.f32.mrb[0].mxu0
      %v358 = vadd.f32 %v242, %v357
      %v359 = vpop.f32.mrb[0].mxu0
      %360 = vmatprep.mubr.f32.mxu0 0.0
      %361 = vmatmul.mubr.f32.gmra.mrb[0].mxu0 %v264
      %v362 = vpop.f32.mrb[0].mxu0
      %v363 = vadd.f32 %v242, %v362
      %v364 = vpop.f32.mrb[0].mxu0
      %365 = vmatprep.mubr.f32.mxu0 0.0
      %366 = vmatmul.mubr.f32.gmra.mrb[0].mxu0 %v265
      %v367 = vpop.f32.mrb[0].mxu0
      %v368 = vadd.f32 %v242, %v367
      %v369 = vpop.f32.mrb[0].mxu0
      %370 = vmatprep.mubr.f32.mxu0 0.0
      %371 = vmatmul.mubr.f32.gmra.mrb[0].mxu0 %v266
      %v372 = vpop.f32.mrb[0].mxu0
      %v373 = vadd.f32 %v242, %v372
      %v374 = vpop.f32.mrb[0].mxu0
      %375 = vmatprep.mubr.f32.mxu0 0.0
      %376 = vmatmul.mubr.f32.gmra.mrb[0].mxu0 %v267
      %v377 = vpop.f32.mrb[0].mxu0
      %v378 = vadd.f32 %v242, %v377
      %v379 = vpop.f32.mrb[0].mxu0
      %380 = vdwg.mxu0
      %vm381 = vcmask 195584
      %382 = vst.msk [vmem:[%s203] sm:$0xff] %vm381, %v343
      %383 = vst.msk [vmem:[%s203 + $0x8] sm:$0xff] %vm381, %v348
      %384 = vst.msk [vmem:[%s203 + $0x10] sm:$0xff] %vm381, %v353
      %385 = vst.msk [vmem:[%s203 + $0x18] sm:$0xff] %vm381, %v358
      %386 = vst.msk [vmem:[%s203 + $0x20] sm:$0xff] %vm381, %v363
      %387 = vst.msk [vmem:[%s203 + $0x28] sm:$0xff] %vm381, %v368
      %388 = vst.msk [vmem:[%s203 + $0x30] sm:$0xff] %vm381, %v373
      %389 = vst.msk [vmem:[%s203 + $0x38] sm:$0xff] %vm381, %v378
      %s390 = smul.u32 8, %s19
      %p391 = scmp.lt.s32.totalorder %s18, 1
      %s392 = scalar_select %p391, %s18, 1
      %p393 = scmp.lt.s32.totalorder %s390, 7
      %s394 = scalar_select %p393, %s390, 7
      %s395 = smul.addr %s392, 8
      %s396 = sadd.s32 %s394, %s395
      %s397 = smul.addr %s396, 8
      %s398 = scalar_lea.vmem %s3, %s397
      // Predicated region
      $region33: #{tpu_custom_call.1} parent=31 // pred_check
        %p399 = pneg %p116
      $region34: #{tpu_custom_call.1} parent=31 // pred_check_branch
        %401 = sbr.rel (%p399) target = $region36
      $region35: #{tpu_custom_call.1} parent=31 // pred_region
        %s402 = smul.u32 8, %s19
      $region36: #{tpu_custom_call.1} parent=31 // pred_fallthru
        _
    $region32: #{tpu_custom_call.1} parent=5 // pred_fallthru
      _
    %p403 = scmp.le.s32.totalorder 2, %s9
    // Predicated region
    $region37: #{tpu_custom_call.1} parent=5 // pred_check
      %p404 = pneg %p403
    $region38: #{tpu_custom_call.1} parent=5 // pred_check_branch
      %406 = sbr.rel (%p404) target = $region40
    $region39: #{tpu_custom_call.1} parent=5 // pred_region
      %s407 = ssub.s32 %s9, 2
      // Predicated region
      $region41: #{tpu_custom_call.1} parent=39 // pred_check
        %p408 = pneg %p122
      $region42: #{tpu_custom_call.1} parent=39 // pred_check_branch
        %410 = sbr.rel (%p408) target = $region44
      $region43: #{tpu_custom_call.1} parent=39 // pred_region
        %s411 = smul.u32 8, %s21
        %p412 = scmp.lt.s32.totalorder %s20, 1
        %s413 = scalar_select %p412, %s20, 1
        %p414 = scmp.lt.s32.totalorder %s411, 7
        %s415 = scalar_select %p414, %s411, 7
        %s416 = smul.addr %s413, 8
        %s417 = sadd.s32 %s415, %s416
        %s418 = smul.addr %s417, 8
        %s419 = scalar_lea.vmem %s3, %s418
      $region44: #{tpu_custom_call.1} parent=39 // pred_fallthru
        _
    $region40: #{tpu_custom_call.1} parent=5 // pred_fallthru
      _
  $region6: #{tpu_custom_call.1} parent=0 // loop_footer
    %s13 = sadd.s32 1, %s9
  $region7: #{tpu_custom_call.1} parent=0 // loop_footer_branch
    %8 = sbr.rel target = $region3
  $region8: #{tpu_custom_call.1} parent=0 // loop_exit
    _

</llo_original>
